<compile_context>
chip_gen: v6e
topology: v6e:2x2x1
jax: 0.10.0
libtpu: 0.0.40
codegen_flags: <defaults>
</compile_context>

<pallas_src>
import numpy as np
import jax
import jax.numpy as jnp
from jax.experimental import pallas as pl
from jax.experimental.pallas import tpu as pltpu

_GAIN = np.float32(np.sqrt(2.0))   # StyleGAN2 leaky-ReLU gain
_CH = 32                           # feature channels at every resolution
_WDIM = 32                         # w-code dimension
_NUM_WS = 8                        # w codes consumed by the synthesis net
_RGB_PAD = 128                     # lane-dense padding of the RGB output


# ----------------------------------------------------------------------------
# Pallas kernels
# ----------------------------------------------------------------------------
def _mapping_kernel(x_ref, w1_ref, b1_ref, w2_ref, b2_ref, o_ref):
    # Fused 2-layer mapping MLP:  x:[B,Din] -> w:[B,W_DIM]
    h = jnp.dot(x_ref[...], w1_ref[...], preferred_element_type=jnp.float32)
    h = h + b1_ref[...]
    h = jnp.where(h >= 0.0, h, 0.2 * h) * _GAIN
    o_ref[...] = (jnp.dot(h, w2_ref[...], preferred_element_type=jnp.float32)
                  + b2_ref[...])


def _synthesis_kernel(styles_ref, const_ref,
                      caw_ref, cab_ref, cw_ref, cwsq_ref, cb_ref, cnoise_ref,
                      raw_ref, rab_ref, rw_ref, rb_ref,
                      u48_ref, u816_ref, out_ref):
    """Fully fused EG3D-style synthesis for ONE batch element (grid over batch).

    Activations stay in VMEM/vregs in channels-last [HW, C] layout the whole
    way; in-kernel im2col (shifted windows), nearest 2x upsample (constant 0/1
    matmul) and the RGB skip accumulation are all fused.  The only HBM write is
    the final lane-dense [256, 128] RGB slab.
    """
    wcodes = styles_ref[...]                                   # [NUM_WS, W_DIM]

    def lrelu(v):
        return jnp.where(v >= 0.0, v, 0.2 * v) * _GAIN

    def affine(ws_idx, aw, ab):
        wrow = wcodes[ws_idx:ws_idx + 1, :]                    # [1, W_DIM]
        return jnp.dot(wrow, aw, preferred_element_type=jnp.float32) + ab

    def shift_rows(v, k):
        # u[i] = v[i + k], zero outside the valid row range (static k).
        c = v.shape[1]
        if k > 0:
            return jnp.concatenate(
                [v[k:, :], jnp.zeros((k, c), jnp.float32)], axis=0)
        if k < 0:
            return jnp.concatenate(
                [jnp.zeros((-k, c), jnp.float32), v[:k, :]], axis=0)
        return v

    def mod_conv3x3(x, res, li, ws_idx):
        # x: [res*res, CH] channels-last; modulated conv + demod + noise + bias
        hw = res * res
        s = affine(ws_idx, caw_ref[li], cab_ref[li])           # [1, CH]
        xm = x * s                                             # modulate
        row = jax.lax.broadcasted_iota(jnp.int32, (hw, 1), 0)
        bits = int(np.log2(res))                               # res is pow2
        hh = row >> bits
        ww = row & (res - 1)
        y = jnp.zeros((hw, _CH), jnp.float32)
        for t in range(9):                                     # 3x3 taps
            dh, dw = t // 3 - 1, t % 3 - 1
            valid = ((hh + dh >= 0) & (hh + dh < res) &
                     (ww + dw >= 0) & (ww + dw < res)).astype(jnp.float32)
            window = shift_rows(xm, dh * res + dw) * valid     # [hw, CH]
            y = y + jnp.dot(window, cw_ref[li, t],
                            preferred_element_type=jnp.float32)
        # demodulation: rsqrt(sum_cin s^2 * sum_taps w^2), Wsq precomputed.
        dmod = jax.lax.rsqrt(
            jnp.dot(s * s, cwsq_ref[li], preferred_element_type=jnp.float32)
            + 1e-8)                                            # [1, CH]
        y = y * dmod
        y = y + cnoise_ref[li][:hw, :]   # const noise, pre-scaled by strength
        y = y + cb_ref[li]
        return lrelu(y)

    def to_rgb(x, ri, ws_idx):
        # 1x1 modulated conv, no demod / noise / lrelu; output lane-padded.
        s = affine(ws_idx, raw_ref[ri], rab_ref[ri])           # [1, CH]
        y = jnp.dot(x * s, rw_ref[ri], preferred_element_type=jnp.float32)
        return y + rb_ref[ri]                                  # [hw, RGB_PAD]

    # ---- resolution 4 -------------------------------------------------------
    x = const_ref[...]                                         # [16, CH]
    x = mod_conv3x3(x, 4, 0, 0)
    img = to_rgb(x, 0, 1)                                      # [16, RGB_PAD]

    # ---- resolution 8 -------------------------------------------------------
    # TODO(synk): StyleGAN2/EG3D use a FIR low-pass upsample; nearest 2x
    #             (expressed as a constant 0/1 matmul) is used here.
    u48 = u48_ref[...]
    x = jnp.dot(u48, x, preferred_element_type=jnp.float32)    # [64, CH]
    x = mod_conv3x3(x, 8, 1, 2)
    x = mod_conv3x3(x, 8, 2, 3)
    img = (jnp.dot(u48, img, preferred_element_type=jnp.float32)
           + to_rgb(x, 1, 4))                                  # [64, RGB_PAD]

    # ---- resolution 16 ------------------------------------------------------
    u816 = u816_ref[...]
    x = jnp.dot(u816, x, preferred_element_type=jnp.float32)   # [256, CH]
    x = mod_conv3x3(x, 16, 3, 5)
    x = mod_conv3x3(x, 16, 4, 6)
    img = (jnp.dot(u816, img, preferred_element_type=jnp.float32)
           + to_rgb(x, 2, 7))                                  # [256, RGB_PAD]

    out_ref[...] = img                                         # dense store


# ----------------------------------------------------------------------------
# helpers
# ----------------------------------------------------------------------------
def _nearest_upsample_matrix(h, w):
    """[4*h*w, h*w] 0/1 matrix implementing nearest 2x spatial upsample."""
    u = np.zeros((4 * h * w, h * w), dtype=np.float32)
    for i in range(h):
        for j in range(w):
            src = i * w + j
            for a in range(2):
                for b in range(2):
                    u[(2 * i + a) * (2 * w) + (2 * j + b), src] = 1.0
    return jnp.asarray(u)


# ----------------------------------------------------------------------------
# Synthetic EG3D-style generator (mapping + synthesis)
# ----------------------------------------------------------------------------
class EG3DGeneratorPallas:
    Z_DIM = 32
    C_DIM = 4
    W_DIM = _WDIM
    HIDDEN = 64
    IMG_CH = 3
    RESOLUTIONS = (4, 8, 16)
    CH = _CH
    NOISE_STRENGTH = 0.1   # noise_mode='const': fixed noise buffer * strength

    _CONV_NAMES = ('b4_conv1', 'b8_conv0', 'b8_conv1', 'b16_conv0', 'b16_conv1')
    _CONV_RES = (4, 8, 8, 16, 16)
    _RGB_NAMES = ('b4_torgb', 'b8_torgb', 'b16_torgb')

    def __init__(self, key):
        p = {}
        keys = iter(jax.random.split(key, 64))

        def nrm(shape, scale=1.0):
            return scale * jax.random.normal(next(keys), shape, dtype=jnp.float32)

        zc = self.Z_DIM + self.C_DIM
        p['map_w1'] = nrm((zc, self.HIDDEN), 1.0 / np.sqrt(zc))
        p['map_b1'] = jnp.zeros((self.HIDDEN,), jnp.float32)
        p['map_w2'] = nrm((self.HIDDEN, self.W_DIM), 1.0 / np.sqrt(self.HIDDEN))
        p['map_b2'] = jnp.zeros((self.W_DIM,), jnp.float32)
        p['const'] = nrm((self.CH, 4, 4))

        for name, res in zip(self._CONV_NAMES, self._CONV_RES):
            p[name + '_aff_w'] = nrm((self.W_DIM, self.CH), 1.0 / np.sqrt(self.W_DIM))
            p[name + '_aff_b'] = jnp.ones((self.CH,), jnp.float32)
            p[name + '_weight'] = nrm((self.CH, self.CH, 3, 3), 1.0 / np.sqrt(self.CH * 9))
            p[name + '_bias'] = jnp.zeros((self.CH,), jnp.float32)
            p[name + '_noise'] = nrm((res * res,))
        for name in self._RGB_NAMES:
            p[name + '_aff_w'] = nrm((self.W_DIM, self.CH), 1.0 / np.sqrt(self.W_DIM))
            p[name + '_aff_b'] = jnp.ones((self.CH,), jnp.float32)
            p[name + '_weight'] = nrm((self.IMG_CH, self.CH, 1, 1), 1.0 / np.sqrt(self.CH))
            p[name + '_bias'] = jnp.zeros((self.IMG_CH,), jnp.float32)

        self.p = p
        self.num_ws = 2 + 3 * (len(self.RESOLUTIONS) - 1)
        assert self.num_ws == _NUM_WS

        # --- mapping params (bias as [1,D] for lane-major broadcast) ---------
        self.map_w1 = p['map_w1']
        self.map_b1 = p['map_b1'].reshape(1, self.HIDDEN)
        self.map_w2 = p['map_w2']
        self.map_b2 = p['map_b2'].reshape(1, self.W_DIM)

        # --- pack synthesis params into stacked, kernel-friendly arrays ------
        self.caw = jnp.stack([p[n + '_aff_w'] for n in self._CONV_NAMES])
        self.cab = jnp.stack([p[n + '_aff_b'].reshape(1, self.CH)
                              for n in self._CONV_NAMES])
        # weight [Cout,Cin,3,3] -> [9, Cin, Cout] (tap-major)
        self.cw = jnp.stack([p[n + '_weight'].transpose(2, 3, 1, 0).reshape(9, self.CH, self.CH)
                             for n in self._CONV_NAMES])
        # demod helper: Wsq[cin,cout] = sum_taps w^2  (hoisted out of the kernel)
        self.cwsq = jnp.stack([jnp.sum(p[n + '_weight'] ** 2, axis=(2, 3)).T
                               for n in self._CONV_NAMES])
        self.cb = jnp.stack([p[n + '_bias'].reshape(1, self.CH)
                             for n in self._CONV_NAMES])
        noise_list = []
        for n, r in zip(self._CONV_NAMES, self._CONV_RES):
            nz = p[n + '_noise'] * self.NOISE_STRENGTH
            nz = jnp.pad(nz, (0, 256 - r * r)).reshape(256, 1)
            noise_list.append(nz)
        self.cnoise = jnp.stack(noise_list)                      # [5, 256, 1]

        self.raw = jnp.stack([p[n + '_aff_w'] for n in self._RGB_NAMES])
        self.rab = jnp.stack([p[n + '_aff_b'].reshape(1, self.CH)
                              for n in self._RGB_NAMES])
        rw_list, rb_list = [], []
        for n in self._RGB_NAMES:
            w = p[n + '_weight'][:, :, 0, 0].T                   # [CH, 3]
            rw_list.append(jnp.pad(w, ((0, 0), (0, _RGB_PAD - self.IMG_CH))))
            rb_list.append(jnp.pad(p[n + '_bias'],
                                   (0, _RGB_PAD - self.IMG_CH)).reshape(1, _RGB_PAD))
        self.rw = jnp.stack(rw_list)                             # [3, CH, 128]
        self.rb = jnp.stack(rb_list)                             # [3, 1, 128]

        self.const2d = p['const'].reshape(self.CH, 16).T         # [16, CH]
        self.u48 = _nearest_upsample_matrix(4, 4)                # [64, 16]
        self.u816 = _nearest_upsample_matrix(8, 8)               # [256, 64]

    # --- mapping (equivalent of self.generator.mapping) ----------------------
    def style(self, z_codes, c, truncation=0.7):
        # NOTE: like the reference module, `truncation` is accepted but not
        # applied here (the wrapped generator.mapping call does not use it).
        z = z_codes[0]
        B = z.shape[0]
        c_rep = jnp.tile(c, (B, 1))                              # c.repeat(B, 1)
        z = z * jax.lax.rsqrt(jnp.mean(z * z, axis=1, keepdims=True) + 1e-8)
        x = jnp.concatenate([z, c_rep], axis=1)                  # [B, Z+C]
        zc = x.shape[1]
        w = pl.pallas_call(
            _mapping_kernel,
            out_shape=jax.ShapeDtypeStruct((B, self.W_DIM), jnp.float32),
            grid=(1,),
            in_specs=[
                pl.BlockSpec((B, zc), lambda i: (0, 0)),
                pl.BlockSpec((zc, self.HIDDEN), lambda i: (0, 0)),
                pl.BlockSpec((1, self.HIDDEN), lambda i: (0, 0)),
                pl.BlockSpec((self.HIDDEN, self.W_DIM), lambda i: (0, 0)),
                pl.BlockSpec((1, self.W_DIM), lambda i: (0, 0)),
            ],
            out_specs=pl.BlockSpec((B, self.W_DIM), lambda i: (0, 0)),
        )(x, self.map_w1, self.map_b1, self.map_w2, self.map_b2)
        return jnp.broadcast_to(w[:, None, :], (B, self.num_ws, self.W_DIM))

    # --- forward (equivalent of generator.synthesis(styles, c, noise_mode='const'))
    def forward(self, styles, c=None, truncation=None, randomize_noise=True):
        B = styles.shape[0]
        out = pl.pallas_call(
            _synthesis_kernel,
            out_shape=jax.ShapeDtypeStruct((B, 256, _RGB_PAD), jnp.float32),
            grid=(B,),
            in_specs=[
                pl.BlockSpec((None, self.num_ws, self.W_DIM), lambda b: (b, 0, 0)),
                pl.BlockSpec((16, self.CH), lambda b: (0, 0)),
                pl.BlockSpec((5, self.W_DIM, self.CH), lambda b: (0, 0, 0)),
                pl.BlockSpec((5, 1, self.CH), lambda b: (0, 0, 0)),
                pl.BlockSpec((5, 9, self.CH, self.CH), lambda b: (0, 0, 0, 0)),
                pl.BlockSpec((5, self.CH, self.CH), lambda b: (0, 0, 0)),
                pl.BlockSpec((5, 1, self.CH), lambda b: (0, 0, 0)),
                pl.BlockSpec((5, 256, 1), lambda b: (0, 0, 0)),
                pl.BlockSpec((3, self.W_DIM, self.CH), lambda b: (0, 0, 0)),
                pl.BlockSpec((3, 1, self.CH), lambda b: (0, 0, 0)),
                pl.BlockSpec((3, self.CH, _RGB_PAD), lambda b: (0, 0, 0)),
                pl.BlockSpec((3, 1, _RGB_PAD), lambda b: (0, 0, 0)),
                pl.BlockSpec((64, 16), lambda b: (0, 0)),
                pl.BlockSpec((256, 64), lambda b: (0, 0)),
            ],
            out_specs=pl.BlockSpec((None, 256, _RGB_PAD), lambda b: (b, 0, 0)),
            compiler_params=pltpu.CompilerParams(
                dimension_semantics=("parallel",)),   # v7x: one batch elem / TC
        )(styles, self.const2d, self.caw, self.cab, self.cw, self.cwsq,
          self.cb, self.cnoise, self.raw, self.rab, self.rw, self.rb,
          self.u48, self.u816)
        img = out[:, :, :self.IMG_CH]                            # [B, 256, 3]
        img = img.reshape(B, 16, 16, self.IMG_CH).transpose(0, 3, 1, 2)
        return img                                               # [B, 3, 16, 16]

    # --- plain-JAX references (used only for the correctness check) ----------
    def _reference_style(self, z_codes, c):
        hi = jax.lax.Precision.HIGHEST
        z = z_codes[0]
        B = z.shape[0]
        c_rep = jnp.tile(c, (B, 1))
        z = z * jax.lax.rsqrt(jnp.mean(z * z, axis=1, keepdims=True) + 1e-8)
        x = jnp.concatenate([z, c_rep], axis=1)
        h = jnp.dot(x, self.map_w1, precision=hi) + self.map_b1
        h = jnp.where(h >= 0.0, h, 0.2 * h) * _GAIN
        w = jnp.dot(h, self.map_w2, precision=hi) + self.map_b2
        return jnp.broadcast_to(w[:, None, :], (B, self.num_ws, self.W_DIM))

    def _reference_forward(self, styles):
        p = self.p
        hi = jax.lax.Precision.HIGHEST
        B = styles.shape[0]

        def lrelu(v):
            return jnp.where(v >= 0.0, v, 0.2 * v) * _GAIN

        def up2(v):
            return jnp.repeat(jnp.repeat(v, 2, axis=2), 2, axis=3)

        def conv(x, wcode, name, res):
            s = jnp.dot(wcode, p[name + '_aff_w'], precision=hi) + p[name + '_aff_b']
            xm = x * s[:, :, None, None]
            wgt = p[name + '_weight']
            y = jax.lax.conv_general_dilated(
                xm, wgt, (1, 1), 'SAME',
                dimension_numbers=('NCHW', 'OIHW', 'NCHW'), precision=hi)
            wsq = jnp.sum(wgt * wgt, axis=(2, 3))                 # [Cout, Cin]
            d = jax.lax.rsqrt(jnp.dot(s * s, wsq.T, precision=hi) + 1e-8)
            y = y * d[:, :, None, None]
            y = y + self.NOISE_STRENGTH * p[name + '_noise'].reshape(1, 1, res, res)
            y = y + p[name + '_bias'][None, :, None, None]
            return lrelu(y)

        def torgb(x, wcode, name):
            s = jnp.dot(wcode, p[name + '_aff_w'], precision=hi) + p[name + '_aff_b']
            xm = x * s[:, :, None, None]
            wgt = p[name + '_weight'][:, :, 0, 0]
            y = jnp.einsum('bchw,oc->bohw', xm, wgt, precision=hi)
            return y + p[name + '_bias'][None, :, None, None]

        x = jnp.broadcast_to(p['const'][None], (B,) + p['const'].shape)
        x = conv(x, styles[:, 0], 'b4_conv1', 4)
        img = torgb(x, styles[:, 1], 'b4_torgb')
        x = up2(x)
        x = conv(x, styles[:, 2], 'b8_conv0', 8)
        x = conv(x, styles[:, 3], 'b8_conv1', 8)
        img = up2(img) + torgb(x, styles[:, 4], 'b8_torgb')
        x = up2(x)
        x = conv(x, styles[:, 5], 'b16_conv0', 16)
        x = conv(x, styles[:, 6], 'b16_conv1', 16)
        img = up2(img) + torgb(x, styles[:, 7], 'b16_torgb')
        return img


if __name__ == "__main__":
    key = jax.random.PRNGKey(0)
    k_params, k_z, k_c = jax.random.split(key, 3)

    gen = EG3DGeneratorPallas(k_params)
    B = 2
    z = jax.random.normal(k_z, (B, gen.Z_DIM), dtype=jnp.float32)
    c = jax.random.normal(k_c, (1, gen.C_DIM), dtype=jnp.float32)

    ws = gen.style([z], c)               # [2, 8, 32]  w codes (Pallas mapping)
    img = gen.forward(ws)                # [2, 3, 16, 16]  NCHW image (Pallas synthesis)
    jax.block_until_ready(img)

    assert ws.shape == (B, gen.num_ws, gen.W_DIM)
    assert img.shape == (B, gen.IMG_CH, 16, 16)
    assert bool(jnp.all(jnp.isfinite(img)))

    # correctness check vs. plain-JAX references
    ws_ref = gen._reference_style([z], c)
    img_ref = gen._reference_forward(ws)
    assert bool(jnp.allclose(ws, ws_ref, atol=2e-2, rtol=2e-2))
    assert bool(jnp.allclose(img, img_ref, atol=2e-2, rtol=2e-2))

    print("KERNEL_OK")
</pallas_src>

<mosaic_0001>
module attributes {stable_mosaic.version = 11 : i64} {
  func.func @_mapping_kernel(%arg0: i32, %arg1: memref<2x36xf32, #tpu.memory_space<vmem>>, %arg2: memref<36x64xf32, #tpu.memory_space<vmem>>, %arg3: memref<1x64xf32, #tpu.memory_space<vmem>>, %arg4: memref<64x32xf32, #tpu.memory_space<vmem>>, %arg5: memref<1x32xf32, #tpu.memory_space<vmem>>, %arg6: memref<2x32xf32, #tpu.memory_space<vmem>>) attributes {dimension_semantics = [#tpu.dimension_semantics<arbitrary>], iteration_bounds = array<i64: 1>, scalar_prefetch = 0 : i64, scratch_operands = 0 : i64, tpu.core_type = #tpu.core_type<tc>, window_params = [{pipeline_mode = #tpu.pipeline_mode<synchronous>, transform_indices = @transform_0, window_bounds = array<i64: 2, 36>}, {pipeline_mode = #tpu.pipeline_mode<synchronous>, transform_indices = @transform_1, window_bounds = array<i64: 36, 64>}, {pipeline_mode = #tpu.pipeline_mode<synchronous>, transform_indices = @transform_2, window_bounds = array<i64: 1, 64>}, {pipeline_mode = #tpu.pipeline_mode<synchronous>, transform_indices = @transform_3, window_bounds = array<i64: 64, 32>}, {pipeline_mode = #tpu.pipeline_mode<synchronous>, transform_indices = @transform_4, window_bounds = array<i64: 1, 32>}, {pipeline_mode = #tpu.pipeline_mode<synchronous>, transform_indices = @transform_5, window_bounds = array<i64: 2, 32>}]} {
    %c0 = arith.constant 0 : index
    %c0_0 = arith.constant 0 : index
    %0 = vector.load %arg1[%c0, %c0_0] : memref<2x36xf32, #tpu.memory_space<vmem>>, vector<2x36xf32>
    %c0_1 = arith.constant 0 : index
    %c0_2 = arith.constant 0 : index
    %1 = vector.load %arg2[%c0_1, %c0_2] : memref<36x64xf32, #tpu.memory_space<vmem>>, vector<36x64xf32>
    %cst = arith.constant dense<0.000000e+00> : vector<2x64xf32>
    %2 = tpu.matmul %0, %1, %cst {dimension_numbers = #tpu.dot_dimension_numbers<[1], [0], [0], [1], [0, 0, 1, 1], [], []>} : vector<2x36xf32>, vector<36x64xf32>, vector<2x64xf32> -> vector<2x64xf32>
    %c0_3 = arith.constant 0 : index
    %c0_4 = arith.constant 0 : index
    %3 = vector.load %arg3[%c0_3, %c0_4] : memref<1x64xf32, #tpu.memory_space<vmem>>, vector<1x64xf32>
    %4 = vector.broadcast %3 : vector<1x64xf32> to vector<2x64xf32>
    %5 = arith.addf %2, %4 : vector<2x64xf32>
    %cst_5 = arith.constant 0.000000e+00 : f32
    %6 = vector.broadcast %cst_5 : f32 to vector<2x64xf32>
    %7 = arith.cmpf oge, %5, %6 : vector<2x64xf32>
    %cst_6 = arith.constant 2.000000e-01 : f32
    %8 = vector.broadcast %cst_6 : f32 to vector<2x64xf32>
    %9 = arith.mulf %8, %5 : vector<2x64xf32>
    %10 = arith.select %7, %5, %9 : vector<2x64xi1>, vector<2x64xf32>
    %cst_7 = arith.constant 1.41421354 : f32
    %11 = vector.broadcast %cst_7 : f32 to vector<2x64xf32>
    %12 = arith.mulf %10, %11 : vector<2x64xf32>
    %c0_8 = arith.constant 0 : index
    %c0_9 = arith.constant 0 : index
    %13 = vector.load %arg4[%c0_8, %c0_9] : memref<64x32xf32, #tpu.memory_space<vmem>>, vector<64x32xf32>
    %cst_10 = arith.constant dense<0.000000e+00> : vector<2x32xf32>
    %14 = tpu.matmul %12, %13, %cst_10 {dimension_numbers = #tpu.dot_dimension_numbers<[1], [0], [0], [1], [0, 0, 1, 1], [], []>} : vector<2x64xf32>, vector<64x32xf32>, vector<2x32xf32> -> vector<2x32xf32>
    %c0_11 = arith.constant 0 : index
    %c0_12 = arith.constant 0 : index
    %15 = vector.load %arg5[%c0_11, %c0_12] : memref<1x32xf32, #tpu.memory_space<vmem>>, vector<1x32xf32>
    %16 = vector.broadcast %15 : vector<1x32xf32> to vector<2x32xf32>
    %17 = arith.addf %14, %16 : vector<2x32xf32>
    %c0_13 = arith.constant 0 : index
    %c0_14 = arith.constant 0 : index
    %18 = vector.load %arg6[%c0_13, %c0_14] : memref<2x32xf32, #tpu.memory_space<vmem>>, vector<2x32xf32>
    tpu.vector_store %arg6[%c0_13, %c0_14], %17 {strides = array<i32>} : memref<2x32xf32, #tpu.memory_space<vmem>>, vector<2x32xf32>,
    return
  }
  func.func @transform_0(%arg0: i32) -> (i32, i32) {
    %c0_i32 = arith.constant 0 : i32
    %c0_i32_0 = arith.constant 0 : i32
    %c0_i32_1 = arith.constant 0 : i32
    return %c0_i32, %c0_i32_0 : i32, i32
  }
  func.func @transform_1(%arg0: i32) -> (i32, i32) {
    %c0_i32 = arith.constant 0 : i32
    %c0_i32_0 = arith.constant 0 : i32
    %c0_i32_1 = arith.constant 0 : i32
    return %c0_i32, %c0_i32_0 : i32, i32
  }
  func.func @transform_2(%arg0: i32) -> (i32, i32) {
    %c0_i32 = arith.constant 0 : i32
    %c0_i32_0 = arith.constant 0 : i32
    %c0_i32_1 = arith.constant 0 : i32
    return %c0_i32, %c0_i32_0 : i32, i32
  }
  func.func @transform_3(%arg0: i32) -> (i32, i32) {
    %c0_i32 = arith.constant 0 : i32
    %c0_i32_0 = arith.constant 0 : i32
    %c0_i32_1 = arith.constant 0 : i32
    return %c0_i32, %c0_i32_0 : i32, i32
  }
  func.func @transform_4(%arg0: i32) -> (i32, i32) {
    %c0_i32 = arith.constant 0 : i32
    %c0_i32_0 = arith.constant 0 : i32
    %c0_i32_1 = arith.constant 0 : i32
    return %c0_i32, %c0_i32_0 : i32, i32
  }
  func.func @transform_5(%arg0: i32) -> (i32, i32) {
    %c0_i32 = arith.constant 0 : i32
    %c0_i32_0 = arith.constant 0 : i32
    %c0_i32_1 = arith.constant 0 : i32
    return %c0_i32, %c0_i32_0 : i32, i32
  }
}

</mosaic_0001>

<llo_original>
// kernel: tpu_custom_call.1
$region0: #{tpu_custom_call.1}
  #allocation0 [shape = 'u32[]', space=smem, size = 0x4, offset = 0x4, fixed_abs, tag = 'smem constant byte address 0x4 - core index']
  #allocation1 [shape = 'u32[144,128]{1,0:T(1,128)}', space=vmem, size = 0x12000, scoped, tag = 'internal scratch']
  %s0 = inlined_call_operand.vmem [shape: f32[2,36], index: 0, kind: input, shape index: {}]
  %s1 = inlined_call_operand.vmem [shape: f32[36,64], index: 1, kind: input, shape index: {}]
  %s2 = inlined_call_operand.vmem [shape: f32[1,64], index: 2, kind: input, shape index: {}]
  %s3 = inlined_call_operand.vmem [shape: f32[64,32], index: 3, kind: input, shape index: {}]
  %s4 = inlined_call_operand.vmem [shape: f32[1,32], index: 4, kind: input, shape index: {}]
  %s5 = inlined_call_operand.hbm [shape: f32[2,32], index: 5, kind: output, shape index: {}]
  %s6 = sld [smem:[#allocation0]]
  $region30: #{tpu_custom_call.1} parent=0
    _
  %s8 = ssub.s32 1, %s6
  %s9 = scalar_select 0, %s8, %s6
  $region1: #{tpu_custom_call.1} parent=0
    #allocation2 [shape = 'u8[1024]{0}', space=vmem, size = 0x400, scoped, tag = 'output window, operand 0, single buffered']
    #allocation3 [shape = 's32[1]{0}', space=sflag, size = 0x4, scoped, tag = 'scoped memory for tpu_custom_call.1']
    %10 = vsyncpa [#allocation3], 0
    // Predicated region
    $region2: #{tpu_custom_call.1} parent=1 // pred_check
      _
    $region3: #{tpu_custom_call.1} parent=1 // pred_check_branch
      %12 = sbr.rel (0) target = $region5
    $region4: #{tpu_custom_call.1} parent=1 // pred_region
      _
    $region5: #{tpu_custom_call.1} parent=1 // pred_fallthru
      _
    // Predicated region
    $region6: #{tpu_custom_call.1} parent=1 // pred_check
      _
    $region7: #{tpu_custom_call.1} parent=1 // pred_check_branch
      %14 = sbr.rel (0) target = $region9
    $region8: #{tpu_custom_call.1} parent=1 // pred_region
      _
    $region9: #{tpu_custom_call.1} parent=1 // pred_fallthru
      _
    // Predicated region
    $region10: #{tpu_custom_call.1} parent=1 // pred_check
      _
    $region11: #{tpu_custom_call.1} parent=1 // pred_check_branch
      %16 = sbr.rel (0) target = $region13
    $region12: #{tpu_custom_call.1} parent=1 // pred_region
      _
    $region13: #{tpu_custom_call.1} parent=1 // pred_fallthru
      _
    // Predicated region
    $region14: #{tpu_custom_call.1} parent=1 // pred_check
      _
    $region15: #{tpu_custom_call.1} parent=1 // pred_check_branch
      %18 = sbr.rel (0) target = $region17
    $region16: #{tpu_custom_call.1} parent=1 // pred_region
      _
    $region17: #{tpu_custom_call.1} parent=1 // pred_fallthru
      _
    // Predicated region
    $region18: #{tpu_custom_call.1} parent=1 // pred_check
      _
    $region19: #{tpu_custom_call.1} parent=1 // pred_check_branch
      %20 = sbr.rel (0) target = $region21
    $region20: #{tpu_custom_call.1} parent=1 // pred_region
      _
    $region21: #{tpu_custom_call.1} parent=1 // pred_fallthru
      _
    %v21 = vld [vmem:[%s0] sm:$0x3]
    %v22 = vld [vmem:[%s1] sm:$0xff]
    %v23 = vld [vmem:[%s1 + $0x8] sm:$0xff]
    %v24 = vld [vmem:[%s1 + $0x10] sm:$0xff]
    %v25 = vld [vmem:[%s1 + $0x18] sm:$0xff]
    %v26 = vld [vmem:[%s1 + $0x20] sm:$0xf]
    %v27 = vld [vmem:[%s2] sm:$0x1]
    %v29 = vlaneseq
    %v30 = vshrl.u32 %v29, 7
    %v31 = vsub.s32 0, %v30
    %v32 = vrot.slane %v27, %v31
    %vm34 = vcmask 293888
    %v36 = vsel %vm34, %v21, 0
    %vm38 = vcmask 1043456
    %v40 = vsel %vm38, %v26, 0
    %42 = vmatprep.subr.mxu0 0.0
    %43 = vmatpush1.msra.mxu0 0.0
    %44 = vmatprep.subr.mxu0 0.0
    %45 = vmatpush1.msra.mxu0 0.0
    %46 = vmatprep.subr.mxu0 0.0
    %47 = vmatpush1.msra.mxu0 0.0
    %48 = vmatprep.subr.mxu0 0.0
    %49 = vmatpush1.msra.mxu0 0.0
    %50 = vmatprep.subr.mxu0 0.0
    %51 = vmatpush1.msra.mxu0 0.0
    %52 = vmatprep.subr.mxu0 0.0
    %53 = vmatpush1.msra.mxu0 0.0
    %54 = vmatprep.subr.mxu0 0.0
    %55 = vmatpush1.msra.mxu0 0.0
    %56 = vmatprep.subr.mxu0 0.0
    %57 = vmatpush1.msra.mxu0 0.0
    %58 = vmatprep.subr.mxu0 0.0
    %59 = vmatpush1.msra.mxu0 0.0
    %60 = vmatprep.subr.mxu0 0.0
    %61 = vmatpush1.msra.mxu0 0.0
    %62 = vmatprep.subr.mxu0 0.0
    %63 = vmatpush1.msra.mxu0 0.0
    %64 = vmatprep.subr.mxu0 0.0
    %65 = vmatpush1.msra.mxu0 %v40
    %66 = vmatprep.subr.mxu0 0.0
    %67 = vmatpush1.msra.mxu0 %v25
    %68 = vmatprep.subr.mxu0 0.0
    %69 = vmatpush1.msra.mxu0 %v24
    %70 = vmatprep.subr.mxu0 0.0
    %71 = vmatpush1.msra.mxu0 %v23
    %72 = vmatprep.subr.mxu0 0.0
    %73 = vmatpush1.msra.mxu0 %v22
    %74 = vmatprep.subr.mxu0 0.0
    %75 = vmatpush2.msra.mxu0 0.0
    %76 = vmatprep.subr.mxu0 0.0
    %77 = vmatpush2.msra.mxu0 0.0
    %78 = vmatprep.subr.mxu0 0.0
    %79 = vmatpush2.msra.mxu0 0.0
    %80 = vmatprep.subr.mxu0 0.0
    %81 = vmatpush2.msra.mxu0 0.0
    %82 = vmatprep.subr.mxu0 0.0
    %83 = vmatpush2.msra.mxu0 0.0
    %84 = vmatprep.subr.mxu0 0.0
    %85 = vmatpush2.msra.mxu0 0.0
    %86 = vmatprep.subr.mxu0 0.0
    %87 = vmatpush2.msra.mxu0 0.0
    %88 = vmatprep.subr.mxu0 0.0
    %89 = vmatpush2.msra.mxu0 0.0
    %90 = vmatprep.subr.mxu0 0.0
    %91 = vmatpush2.msra.mxu0 0.0
    %92 = vmatprep.subr.mxu0 0.0
    %93 = vmatpush2.msra.mxu0 0.0
    %94 = vmatprep.subr.mxu0 0.0
    %95 = vmatpush2.msra.mxu0 0.0
    %96 = vmatprep.subr.mxu0 0.0
    %97 = vmatpush2.msra.mxu0 0.0
    %98 = vmatprep.subr.mxu0 0.0
    %99 = vmatpush2.msra.mxu0 0.0
    %100 = vmatprep.subr.mxu0 0.0
    %101 = vmatpush2.msra.mxu0 0.0
    %102 = vmatprep.subr.mxu0 0.0
    %103 = vmatpush2.msra.mxu0 0.0
    %104 = vmatprep.subr.mxu0 0.0
    %105 = vmatpush2.msra.mxu0 0.0
    %106 = vmatprep.mubr.f32.mxu0 0.0
    %107 = vmatmul.mubr.f32.gmra.mxu0 %v36
    %v108 = vpop.f32.mrf.mxu0
    %v109 = vadd.f32 %v32, %v108
    %v110 = vpop.f32.mrf.mxu0
    %111 = vdwg.mxu0
    %vm112 = vcmp.ge.f32.partialorder %v109, 0.0
    %v113 = vmul.f32 %v109, 0.2
    %v114 = vsel %vm112, %v109, %v113
    %v115 = vmul.f32 %v114, 1.4142135
    %v116 = vld [vmem:[%s3] sm:$0xff]
    %v117 = vld [vmem:[%s3 + $0x8] sm:$0xff]
    %v118 = vld [vmem:[%s3 + $0x10] sm:$0xff]
    %v119 = vld [vmem:[%s3 + $0x18] sm:$0xff]
    %v120 = vld [vmem:[%s3 + $0x20] sm:$0xff]
    %v121 = vld [vmem:[%s3 + $0x28] sm:$0xff]
    %v122 = vld [vmem:[%s3 + $0x30] sm:$0xff]
    %v123 = vld [vmem:[%s3 + $0x38] sm:$0xff]
    %v124 = vld [vmem:[%s4] sm:$0x1]
    %v126 = vlaneseq
    %v127 = vshrl.u32 %v126, 7
    %v128 = vsub.s32 0, %v127
    %v129 = vrot.slane %v124, %v128
    %vm131 = vcmask 523264
    %v133 = vsel %vm131, %v115, 0
    %135 = vmatprep.subr.mxu0 0.0
    %136 = vmatpush1.msra.mxu0 0.0
    %137 = vmatprep.subr.mxu0 0.0
    %138 = vmatpush1.msra.mxu0 0.0
    %139 = vmatprep.subr.mxu0 0.0
    %140 = vmatpush1.msra.mxu0 0.0
    %141 = vmatprep.subr.mxu0 0.0
    %142 = vmatpush1.msra.mxu0 0.0
    %143 = vmatprep.subr.mxu0 0.0
    %144 = vmatpush1.msra.mxu0 0.0
    %145 = vmatprep.subr.mxu0 0.0
    %146 = vmatpush1.msra.mxu0 0.0
    %147 = vmatprep.subr.mxu0 0.0
    %148 = vmatpush1.msra.mxu0 0.0
    %149 = vmatprep.subr.mxu0 0.0
    %150 = vmatpush1.msra.mxu0 0.0
    %151 = vmatprep.subr.mxu0 0.0
    %152 = vmatpush1.msra.mxu0 %v123
    %153 = vmatprep.subr.mxu0 0.0
    %154 = vmatpush1.msra.mxu0 %v122
    %155 = vmatprep.subr.mxu0 0.0
    %156 = vmatpush1.msra.mxu0 %v121
    %157 = vmatprep.subr.mxu0 0.0
    %158 = vmatpush1.msra.mxu0 %v120
    %159 = vmatprep.subr.mxu0 0.0
    %160 = vmatpush1.msra.mxu0 %v119
    %161 = vmatprep.subr.mxu0 0.0
    %162 = vmatpush1.msra.mxu0 %v118
    %163 = vmatprep.subr.mxu0 0.0
    %164 = vmatpush1.msra.mxu0 %v117
    %165 = vmatprep.subr.mxu0 0.0
    %166 = vmatpush1.msra.mxu0 %v116
    %167 = vmatprep.subr.mxu0 0.0
    %168 = vmatpush2.msra.mxu0 0.0
    %169 = vmatprep.subr.mxu0 0.0
    %170 = vmatpush2.msra.mxu0 0.0
    %171 = vmatprep.subr.mxu0 0.0
    %172 = vmatpush2.msra.mxu0 0.0
    %173 = vmatprep.subr.mxu0 0.0
    %174 = vmatpush2.msra.mxu0 0.0
    %175 = vmatprep.subr.mxu0 0.0
    %176 = vmatpush2.msra.mxu0 0.0
    %177 = vmatprep.subr.mxu0 0.0
    %178 = vmatpush2.msra.mxu0 0.0
    %179 = vmatprep.subr.mxu0 0.0
    %180 = vmatpush2.msra.mxu0 0.0
    %181 = vmatprep.subr.mxu0 0.0
    %182 = vmatpush2.msra.mxu0 0.0
    %183 = vmatprep.subr.mxu0 0.0
    %184 = vmatpush2.msra.mxu0 0.0
    %185 = vmatprep.subr.mxu0 0.0
    %186 = vmatpush2.msra.mxu0 0.0
    %187 = vmatprep.subr.mxu0 0.0
    %188 = vmatpush2.msra.mxu0 0.0
    %189 = vmatprep.subr.mxu0 0.0
    %190 = vmatpush2.msra.mxu0 0.0
    %191 = vmatprep.subr.mxu0 0.0
    %192 = vmatpush2.msra.mxu0 0.0
    %193 = vmatprep.subr.mxu0 0.0
    %194 = vmatpush2.msra.mxu0 0.0
    %195 = vmatprep.subr.mxu0 0.0
    %196 = vmatpush2.msra.mxu0 0.0
    %197 = vmatprep.subr.mxu0 0.0
    %198 = vmatpush2.msra.mxu0 0.0
    %199 = vmatprep.mubr.f32.mxu0 0.0
    %200 = vmatmul.mubr.f32.gmra.mxu0 %v133
    %v201 = vpop.f32.mrf.mxu0
    %v202 = vadd.f32 %v129, %v201
    %v203 = vpop.f32.mrf.mxu0
    %204 = vdwg.mxu0
    %vm205 = vcmask 254976
    %206 = vst.msk [vmem:[#allocation2] sm:$0x3] %vm205, %v202
    // Predicated region
    $region22: #{tpu_custom_call.1} parent=1 // pred_check
      _
    $region23: #{tpu_custom_call.1} parent=1 // pred_check_branch
      %208 = sbr.rel (0) target = $region25
    $region24: #{tpu_custom_call.1} parent=1 // pred_region
      %s210 = ssub.s32 32, 32
      %211 = vsyncadd [#allocation3], %s210
      %s213 = sshll.u32 [#allocation2], 4
      %s214 = int_to_ptr.vmem [resolvable:$true] %s213
      %216 = dma.vmem_to_hbm [thread:$0]  %s214, 32, %s5, [#allocation3]
    $region25: #{tpu_custom_call.1} parent=1 // pred_fallthru
      _
    // Predicated region
    $region26: #{tpu_custom_call.1} parent=1 // pred_check
      _
    $region27: #{tpu_custom_call.1} parent=1 // pred_check_branch
      %218 = sbr.rel (0) target = $region29
    $region28: #{tpu_custom_call.1} parent=1 // pred_region
      %219 = dma.done [#allocation3], 32
    $region29: #{tpu_custom_call.1} parent=1 // pred_fallthru
      _
    %220 = vsyncpa [#allocation3], 1

</llo_original>
